<compile_context>
chip_gen: v7x
topology: tpu7x:2x2x1
jax: 0.10.0
libtpu: 0.0.40
codegen_flags: <defaults>
</compile_context>

<pallas_src>
from functools import partial

import jax
import jax.numpy as jnp
from jax.experimental import pallas as pl
from jax.experimental.pallas import tpu as pltpu


def _patch_embed_kernel(p_ref, w_ref, b_ref, o_ref):
    # One M-tile: (TM, Kp) @ (Kp, Np) on the MXU, f32 accumulation, + bias.
    acc = jnp.dot(p_ref[...], w_ref[...], preferred_element_type=jnp.float32)
    o_ref[...] = (acc + b_ref[...].astype(jnp.float32)).astype(o_ref.dtype)


def _round_up(x, m):
    return (x + m - 1) // m * m


def _choose_tm(m_pad, kp, np_, itemsize, vmem_budget_bytes=32 * 1024 * 1024):
    """Largest row tile (multiple of 8) whose working set fits the budget.

    Budget is conservative (<= default scoped VMEM on all of v5e/v6e/v7x):
    double-buffered patch + output tiles, plus the resident weight and bias.
    """
    for tm in (1024, 512, 256, 128, 64, 32, 16, 8):
        if tm > m_pad:
            continue
        need = 2 * tm * (kp + np_) * itemsize + 2 * (kp * np_ + np_) * itemsize
        if need <= vmem_budget_bytes:
            return tm
    return 8


@partial(jax.jit, static_argnames=("patch_size", "compute_dtype"))
def patch_embed_forward(x, weight, bias, patch_size, compute_dtype=None):
    """x: (B, C, H, W) NCHW, weight: (E, C, ph, pw), bias: (E,).

    Returns (B, num_patches, E), identical to the PyTorch PatchEmbed.forward.
    `compute_dtype` (e.g. jnp.bfloat16) optionally casts the matmul operands
    for higher MXU throughput on v6e/v7x; accumulation stays f32.
    """
    B, C, H, W = x.shape
    ph, pw = patch_size
    E = weight.shape[0]
    assert H % ph == 0 and W % pw == 0
    Hp, Wp = H // ph, W // pw
    P = Hp * Wp

    # --- glue: non-overlapping patches, flattened in (c, kh, kw) order so the
    # contraction matches the Conv2d weight layout exactly.
    patches = x.reshape(B, C, Hp, ph, Wp, pw)
    patches = patches.transpose(0, 2, 4, 1, 3, 5)      # (B, Hp, Wp, C, ph, pw)
    patches = patches.reshape(B * P, C * ph * pw)      # (M, K)
    w_mat = weight.reshape(E, C * ph * pw).T           # (K, N)
    b_mat = bias.reshape(1, E)                         # (1, N)

    op_dtype = compute_dtype if compute_dtype is not None else x.dtype
    patches = patches.astype(op_dtype)
    w_mat = w_mat.astype(op_dtype)
    b_mat = b_mat.astype(op_dtype)

    M, K = patches.shape
    N = E

    # --- pad to TPU-friendly shapes: lane-dense N, 128-aligned K, TM-aligned M.
    Kp = _round_up(K, 128)
    Np = _round_up(N, 128)
    itemsize = jnp.dtype(op_dtype).itemsize
    TM = _choose_tm(_round_up(M, 8), Kp, Np, itemsize)
    Mp = _round_up(M, TM)

    patches_p = jnp.pad(patches, ((0, Mp - M), (0, Kp - K)))
    w_p = jnp.pad(w_mat, ((0, Kp - K), (0, Np - N)))
    b_p = jnp.pad(b_mat, ((0, 0), (0, Np - N)))

    cost = pl.CostEstimate(
        flops=2 * Mp * Kp * Np,
        transcendentals=0,
        bytes_accessed=itemsize * (Mp * Kp + Kp * Np + Np)
        + jnp.dtype(x.dtype).itemsize * Mp * Np,
    )

    out = pl.pallas_call(
        _patch_embed_kernel,
        out_shape=jax.ShapeDtypeStruct((Mp, Np), x.dtype),
        grid=(Mp // TM,),
        in_specs=[
            pl.BlockSpec((TM, Kp), lambda i: (i, 0)),   # patch rows: tiled over M
            pl.BlockSpec((Kp, Np), lambda i: (0, 0)),   # weight: resident
            pl.BlockSpec((1, Np), lambda i: (0, 0)),    # bias: resident
        ],
        out_specs=pl.BlockSpec((TM, Np), lambda i: (i, 0)),
        compiler_params=pltpu.CompilerParams(
            dimension_semantics=("parallel",),          # shardable across TCs (v7x)
            vmem_limit_bytes=64 * 1024 * 1024,
        ),
        cost_estimate=cost,
    )(patches_p, w_p, b_p)

    return out[:M, :N].reshape(B, P, E)


if __name__ == "__main__":
    # Small, module-consistent shapes: img_size=16, patch_size=4,
    # in_chans=4, embed_dim=32, batch=2  ->  num_patches = 16.
    B, C, H, W = 2, 4, 16, 16
    ph, pw = 4, 4
    E = 32

    key = jax.random.PRNGKey(0)
    kx, kw, kb = jax.random.split(key, 3)
    x = jax.random.normal(kx, (B, C, H, W), dtype=jnp.float32)
    # Deterministic synthetic Conv2d parameters (same shapes as nn.Conv2d).
    weight = jax.random.normal(kw, (E, C, ph, pw), dtype=jnp.float32) * 0.02
    bias = jax.random.normal(kb, (E,), dtype=jnp.float32) * 0.02

    out = patch_embed_forward(x, weight, bias, (ph, pw))
    out = jax.block_until_ready(out)

    # Reference: strided conv (NCHW, OIHW) then flatten(2).transpose(1,2).
    ref = jax.lax.conv_general_dilated(
        x, weight, window_strides=(ph, pw), padding="VALID",
        dimension_numbers=("NCHW", "OIHW", "NCHW"))
    ref = ref + bias.reshape(1, E, 1, 1)
    ref = ref.reshape(B, E, -1).transpose(0, 2, 1)

    assert out.shape == (B, (H // ph) * (W // pw), E)
    assert jnp.allclose(out, ref, atol=1e-4, rtol=1e-4)
    print("KERNEL_OK")
</pallas_src>

<mosaic_0001>
module attributes {stable_mosaic.version = 11 : i64} {
  func.func @_patch_embed_kernel(%arg0: i32, %arg1: memref<32x128xf32, #tpu.memory_space<vmem>>, %arg2: memref<128x128xf32, #tpu.memory_space<vmem>>, %arg3: memref<1x128xf32, #tpu.memory_space<vmem>>, %arg4: memref<32x128xf32, #tpu.memory_space<vmem>>) attributes {dimension_semantics = [#tpu.dimension_semantics<parallel>], iteration_bounds = array<i64: 1>, scalar_prefetch = 0 : i64, scratch_operands = 0 : i64, tpu.core_type = #tpu.core_type<tc>, window_params = [{transform_indices = @transform_0, window_bounds = array<i64: 32, 128>}, {pipeline_mode = #tpu.pipeline_mode<synchronous>, transform_indices = @transform_1, window_bounds = array<i64: 128, 128>}, {pipeline_mode = #tpu.pipeline_mode<synchronous>, transform_indices = @transform_2, window_bounds = array<i64: 1, 128>}, {transform_indices = @transform_3, window_bounds = array<i64: 32, 128>}]} {
    %c0 = arith.constant 0 : index
    %c0_0 = arith.constant 0 : index
    %0 = vector.load %arg1[%c0, %c0_0] : memref<32x128xf32, #tpu.memory_space<vmem>>, vector<32x128xf32>
    %c0_1 = arith.constant 0 : index
    %c0_2 = arith.constant 0 : index
    %1 = vector.load %arg2[%c0_1, %c0_2] : memref<128x128xf32, #tpu.memory_space<vmem>>, vector<128x128xf32>
    %cst = arith.constant dense<0.000000e+00> : vector<32x128xf32>
    %2 = tpu.matmul %0, %1, %cst {dimension_numbers = #tpu.dot_dimension_numbers<[1], [0], [0], [1], [0, 0, 1, 1], [], []>} : vector<32x128xf32>, vector<128x128xf32>, vector<32x128xf32> -> vector<32x128xf32>
    %c0_3 = arith.constant 0 : index
    %c0_4 = arith.constant 0 : index
    %3 = vector.load %arg3[%c0_3, %c0_4] : memref<1x128xf32, #tpu.memory_space<vmem>>, vector<1x128xf32>
    %4 = vector.broadcast %3 : vector<1x128xf32> to vector<32x128xf32>
    %5 = arith.addf %2, %4 : vector<32x128xf32>
    %c0_5 = arith.constant 0 : index
    %c0_6 = arith.constant 0 : index
    %6 = vector.load %arg4[%c0_5, %c0_6] : memref<32x128xf32, #tpu.memory_space<vmem>>, vector<32x128xf32>
    tpu.vector_store %arg4[%c0_5, %c0_6], %5 {strides = array<i32>} : memref<32x128xf32, #tpu.memory_space<vmem>>, vector<32x128xf32>,
    return
  }
  func.func @transform_0(%arg0: i32) -> (i32, i32) {
    %c0_i32 = arith.constant 0 : i32
    %c0_i32_0 = arith.constant 0 : i32
    return %arg0, %c0_i32 : i32, i32
  }
  func.func @transform_1(%arg0: i32) -> (i32, i32) {
    %c0_i32 = arith.constant 0 : i32
    %c0_i32_0 = arith.constant 0 : i32
    %c0_i32_1 = arith.constant 0 : i32
    return %c0_i32, %c0_i32_0 : i32, i32
  }
  func.func @transform_2(%arg0: i32) -> (i32, i32) {
    %c0_i32 = arith.constant 0 : i32
    %c0_i32_0 = arith.constant 0 : i32
    %c0_i32_1 = arith.constant 0 : i32
    return %c0_i32, %c0_i32_0 : i32, i32
  }
  func.func @transform_3(%arg0: i32) -> (i32, i32) {
    %c0_i32 = arith.constant 0 : i32
    %c0_i32_0 = arith.constant 0 : i32
    return %arg0, %c0_i32 : i32, i32
  }
}

</mosaic_0001>

<llo_original>
// kernel: patch_embed_forward.1
$region0: #{patch_embed_forward.1}
  #allocation0 [shape = 'u32[]', space=smem, size = 0x4, offset = 0x4, fixed_abs, tag = 'smem constant byte address 0x4 - core index']
  #allocation1 [shape = 'u32[144,128]{1,0:T(1,128)}', space=vmem, size = 0x12000, scoped, tag = 'internal scratch']
  %s0 = inlined_call_operand.hbm [shape: f32[32,128], index: 0, kind: input, shape index: {}]
  %s1 = inlined_call_operand.hbm [shape: f32[128,128], index: 1, kind: input, shape index: {}]
  %s2 = inlined_call_operand.hbm [shape: f32[1,128], index: 2, kind: input, shape index: {}]
  %s3 = inlined_call_operand.hbm [shape: f32[32,128], index: 3, kind: output, shape index: {}]
  %s4 = sld [smem:[#allocation0]]
  $region34: #{patch_embed_forward.1} parent=0
    _
  %s6 = ssub.s32 1, %s4
  %s7 = scalar_select 0, %s6, %s4
  $region1: #{patch_embed_forward.1} parent=0
    #allocation2 [shape = 'u8[16384]{0}', space=vmem, size = 0x4000, scoped, tag = 'input window, operand 0, single buffered']
    #allocation3 [shape = 's32[1]{0}', space=sflag, size = 0x4, scoped, tag = 'scoped memory for patch_embed_forward.1']
    #allocation4 [shape = 's32[1]{0}', space=sflag, size = 0x4, scoped, tag = 'scoped memory for patch_embed_forward.1']
    #allocation5 [shape = 'u8[65536]{0}', space=vmem, size = 0x10000, scoped, tag = 'input window, operand 1, single buffered']
    #allocation6 [shape = 's32[1]{0}', space=sflag, size = 0x4, scoped, tag = 'scoped memory for patch_embed_forward.1']
    #allocation7 [shape = 'u8[512]{0}', space=vmem, size = 0x400, scoped, tag = 'input window, operand 2, single buffered']
    #allocation8 [shape = 'u8[16384]{0}', space=vmem, size = 0x4000, scoped, tag = 'output window, operand 0, single buffered']
    %8 = vsyncpa [#allocation3], 0
    %9 = vsyncpa [#allocation6], 0
    %10 = vsyncpa [#allocation4], 0
    // Predicated region
    $region2: #{patch_embed_forward.1} parent=1 // pred_check
      _
    $region3: #{patch_embed_forward.1} parent=1 // pred_check_branch
      %12 = sbr.rel (0) target = $region5
    $region4: #{patch_embed_forward.1} parent=1 // pred_region
      %s14 = ssub.s32 512, 512
      %15 = vsyncadd [#allocation3], %s14
      %s16 = sshll.u32 [#allocation2], 4
      %s17 = int_to_ptr.vmem [resolvable:$true] %s16
      %22 = dma.hbm_to_vmem [thread:$0]  %s0, 512, %s17, [#allocation3], 128, 128, 8
    $region5: #{patch_embed_forward.1} parent=1 // pred_fallthru
      _
    // Predicated region
    $region6: #{patch_embed_forward.1} parent=1 // pred_check
      _
    $region7: #{patch_embed_forward.1} parent=1 // pred_check_branch
      %24 = sbr.rel (0) target = $region9
    $region8: #{patch_embed_forward.1} parent=1 // pred_region
      %s26 = ssub.s32 2048, 2048
      %27 = vsyncadd [#allocation6], %s26
      %s28 = sshll.u32 [#allocation5], 4
      %s29 = int_to_ptr.vmem [resolvable:$true] %s28
      %34 = dma.hbm_to_vmem [thread:$0]  %s1, 2048, %s29, [#allocation6], 128, 128, 8
    $region9: #{patch_embed_forward.1} parent=1 // pred_fallthru
      _
    // Predicated region
    $region10: #{patch_embed_forward.1} parent=1 // pred_check
      _
    $region11: #{patch_embed_forward.1} parent=1 // pred_check_branch
      %36 = sbr.rel (0) target = $region13
    $region12: #{patch_embed_forward.1} parent=1 // pred_region
      %s38 = ssub.s32 16, 16
      %39 = vsyncadd [#allocation6], %s38
      %s41 = sshll.u32 [#allocation7], 4
      %s42 = int_to_ptr.vmem [resolvable:$true] %s41
      %44 = dma.hbm_to_vmem [thread:$0]  %s2, 16, %s42, [#allocation6]
    $region13: #{patch_embed_forward.1} parent=1 // pred_fallthru
      _
    // Predicated region
    $region14: #{patch_embed_forward.1} parent=1 // pred_check
      _
    $region15: #{patch_embed_forward.1} parent=1 // pred_check_branch
      %46 = sbr.rel (0) target = $region17
    $region16: #{patch_embed_forward.1} parent=1 // pred_region
      %47 = dma.done [#allocation3], 512
    $region17: #{patch_embed_forward.1} parent=1 // pred_fallthru
      _
    // Predicated region
    $region18: #{patch_embed_forward.1} parent=1 // pred_check
      _
    $region19: #{patch_embed_forward.1} parent=1 // pred_check_branch
      %49 = sbr.rel (0) target = $region21
    $region20: #{patch_embed_forward.1} parent=1 // pred_region
      %50 = dma.done [#allocation6], 2048
    $region21: #{patch_embed_forward.1} parent=1 // pred_fallthru
      _
    // Predicated region
    $region22: #{patch_embed_forward.1} parent=1 // pred_check
      _
    $region23: #{patch_embed_forward.1} parent=1 // pred_check_branch
      %52 = sbr.rel (0) target = $region25
    $region24: #{patch_embed_forward.1} parent=1 // pred_region
      %53 = dma.done [#allocation6], 16
    $region25: #{patch_embed_forward.1} parent=1 // pred_fallthru
      _
    %v54 = vld [vmem:[#allocation2] sm:$0xff]
    %v55 = vld [vmem:[#allocation2 + $0x8] sm:$0xff]
    %v56 = vld [vmem:[#allocation2 + $0x10] sm:$0xff]
    %v57 = vld [vmem:[#allocation2 + $0x18] sm:$0xff]
    %v58 = vld [vmem:[#allocation5] sm:$0xff]
    %v59 = vld [vmem:[#allocation5 + $0x8] sm:$0xff]
    %v60 = vld [vmem:[#allocation5 + $0x10] sm:$0xff]
    %v61 = vld [vmem:[#allocation5 + $0x18] sm:$0xff]
    %v62 = vld [vmem:[#allocation5 + $0x20] sm:$0xff]
    %v63 = vld [vmem:[#allocation5 + $0x28] sm:$0xff]
    %v64 = vld [vmem:[#allocation5 + $0x30] sm:$0xff]
    %v65 = vld [vmem:[#allocation5 + $0x38] sm:$0xff]
    %v66 = vld [vmem:[#allocation5 + $0x40] sm:$0xff]
    %v67 = vld [vmem:[#allocation5 + $0x48] sm:$0xff]
    %v68 = vld [vmem:[#allocation5 + $0x50] sm:$0xff]
    %v69 = vld [vmem:[#allocation5 + $0x58] sm:$0xff]
    %v70 = vld [vmem:[#allocation5 + $0x60] sm:$0xff]
    %v71 = vld [vmem:[#allocation5 + $0x68] sm:$0xff]
    %v72 = vld [vmem:[#allocation5 + $0x70] sm:$0xff]
    %v73 = vld [vmem:[#allocation5 + $0x78] sm:$0xff]
    %v74 = vld [vmem:[#allocation7] sm:$0x1]
    %v76 = vlaneseq
    %v77 = vshrl.u32 %v76, 7
    %v78 = vsub.s32 0, %v77
    %v79 = vrot.slane %v74, %v78
    %81 = vmatprep.subr.mxu0 0.0
    %82 = vmatpush1.msra.mxu0 %v58
    %83 = vmatprep.subr.mxu0 0.0
    %84 = vmatpush1.msra.mxu0 %v59
    %85 = vmatprep.subr.mxu0 0.0
    %86 = vmatpush1.msra.mxu0 %v60
    %87 = vmatprep.subr.mxu0 0.0
    %88 = vmatpush1.msra.mxu0 %v61
    %89 = vmatprep.subr.mxu0 0.0
    %90 = vmatpush1.msra.mxu0 %v62
    %91 = vmatprep.subr.mxu0 0.0
    %92 = vmatpush1.msra.mxu0 %v63
    %93 = vmatprep.subr.mxu0 0.0
    %94 = vmatpush1.msra.mxu0 %v64
    %95 = vmatprep.subr.mxu0 0.0
    %96 = vmatpush1.msra.mxu0 %v65
    %97 = vmatprep.subr.mxu0 0.0
    %98 = vmatpush1.msra.mxu0 %v66
    %99 = vmatprep.subr.mxu0 0.0
    %100 = vmatpush1.msra.mxu0 %v67
    %101 = vmatprep.subr.mxu0 0.0
    %102 = vmatpush1.msra.mxu0 %v68
    %103 = vmatprep.subr.mxu0 0.0
    %104 = vmatpush1.msra.mxu0 %v69
    %105 = vmatprep.subr.mxu0 0.0
    %106 = vmatpush1.msra.mxu0 %v70
    %107 = vmatprep.subr.mxu0 0.0
    %108 = vmatpush1.msra.mxu0 %v71
    %109 = vmatprep.subr.mxu0 0.0
    %110 = vmatpush1.msra.mxu0 %v72
    %111 = vmatprep.subr.mxu0 0.0
    %112 = vmatpush1.msra.mxu0 %v73
    %113 = vmatprep.subr.mxu0 0.0
    %114 = vmatpush1.msra.mxu0 0.0
    %115 = vmatprep.subr.mxu0 0.0
    %116 = vmatpush1.msra.mxu0 0.0
    %117 = vmatprep.subr.mxu0 0.0
    %118 = vmatpush1.msra.mxu0 0.0
    %119 = vmatprep.subr.mxu0 0.0
    %120 = vmatpush1.msra.mxu0 0.0
    %121 = vmatprep.subr.mxu0 0.0
    %122 = vmatpush1.msra.mxu0 0.0
    %123 = vmatprep.subr.mxu0 0.0
    %124 = vmatpush1.msra.mxu0 0.0
    %125 = vmatprep.subr.mxu0 0.0
    %126 = vmatpush1.msra.mxu0 0.0
    %127 = vmatprep.subr.mxu0 0.0
    %128 = vmatpush1.msra.mxu0 0.0
    %129 = vmatprep.subr.mxu0 0.0
    %130 = vmatpush1.msra.mxu0 0.0
    %131 = vmatprep.subr.mxu0 0.0
    %132 = vmatpush1.msra.mxu0 0.0
    %133 = vmatprep.subr.mxu0 0.0
    %134 = vmatpush1.msra.mxu0 0.0
    %135 = vmatprep.subr.mxu0 0.0
    %136 = vmatpush1.msra.mxu0 0.0
    %137 = vmatprep.subr.mxu0 0.0
    %138 = vmatpush1.msra.mxu0 0.0
    %139 = vmatprep.subr.mxu0 0.0
    %140 = vmatpush1.msra.mxu0 0.0
    %141 = vmatprep.subr.mxu0 0.0
    %142 = vmatpush1.msra.mxu0 0.0
    %143 = vmatprep.subr.mxu0 0.0
    %144 = vmatpush1.msra.mxu0 0.0
    %145 = vmatprep.mubr.f32.mxu0 0.0
    %146 = vmatmul.mubr.f32.gmra.mrb[0].mxu0 %v54
    %v147 = vpop.f32.mrb[0].mxu0
    %v148 = vadd.f32 %v79, %v147
    %v149 = vpop.f32.mrb[0].mxu0
    %150 = vmatprep.mubr.f32.mxu0 0.0
    %151 = vmatmul.mubr.f32.gmra.mrb[0].mxu0 %v55
    %v152 = vpop.f32.mrb[0].mxu0
    %v153 = vadd.f32 %v79, %v152
    %v154 = vpop.f32.mrb[0].mxu0
    %155 = vmatprep.mubr.f32.mxu0 0.0
    %156 = vmatmul.mubr.f32.gmra.mrb[0].mxu0 %v56
    %v157 = vpop.f32.mrb[0].mxu0
    %v158 = vadd.f32 %v79, %v157
    %v159 = vpop.f32.mrb[0].mxu0
    %160 = vmatprep.mubr.f32.mxu0 0.0
    %161 = vmatmul.mubr.f32.gmra.mrb[0].mxu0 %v57
    %v162 = vpop.f32.mrb[0].mxu0
    %v163 = vadd.f32 %v79, %v162
    %v164 = vpop.f32.mrb[0].mxu0
    %165 = vdwg.mxu0
    %166 = vst [vmem:[#allocation8] sm:$0xff] %v148
    %167 = vst [vmem:[#allocation8 + $0x8] sm:$0xff] %v153
    %168 = vst [vmem:[#allocation8 + $0x10] sm:$0xff] %v158
    %169 = vst [vmem:[#allocation8 + $0x18] sm:$0xff] %v163
    // Predicated region
    $region26: #{patch_embed_forward.1} parent=1 // pred_check
      _
    $region27: #{patch_embed_forward.1} parent=1 // pred_check_branch
      %171 = sbr.rel (0) target = $region29
    $region28: #{patch_embed_forward.1} parent=1 // pred_region
      %s173 = ssub.s32 512, 512
      %174 = vsyncadd [#allocation4], %s173
      %s175 = sshll.u32 [#allocation8], 4
      %s176 = int_to_ptr.vmem [resolvable:$true] %s175
      %181 = dma.vmem_to_hbm [thread:$0]  %s176, 512, %s3, [#allocation4], 128, 128, 8
    $region29: #{patch_embed_forward.1} parent=1 // pred_fallthru
      _
    // Predicated region
    $region30: #{patch_embed_forward.1} parent=1 // pred_check
      _
    $region31: #{patch_embed_forward.1} parent=1 // pred_check_branch
      %183 = sbr.rel (0) target = $region33
    $region32: #{patch_embed_forward.1} parent=1 // pred_region
      %184 = dma.done [#allocation4], 512
    $region33: #{patch_embed_forward.1} parent=1 // pred_fallthru
      _
    %185 = vsyncpa [#allocation3], 1
    %186 = vsyncpa [#allocation6], 1
    %187 = vsyncpa [#allocation4], 1

</llo_original>
